<compile_context>
chip_gen: v7x
topology: tpu7x:2x2x1
jax: 0.10.0
libtpu: 0.0.40
codegen_flags: <defaults>
</compile_context>

<pallas_src>
import jax
import jax.numpy as jnp
from jax.experimental import pallas as pl
from jax.experimental.pallas import tpu as pltpu


def planar_flow_kernel(s_ref, z_ref, w_ref, u_ref, znew_ref, det_ref):
    # s_ref: (2,) f32 in SMEM -> [b, w·u]
    # z_ref: (TB, D); w_ref/u_ref: (1, D); znew_ref: (TB, D); det_ref: (TB, 1) f32
    z = z_ref[...].astype(jnp.float32)                    # (TB, D)
    w = w_ref[...].astype(jnp.float32)                    # (1, D)
    u = u_ref[...].astype(jnp.float32)                    # (1, D)
    b = s_ref[0]                                          # scalar
    w_dot_u = s_ref[1]                                    # scalar

    # linear = z @ w + b  as a lane reduction (VPU mul + XLU reduce; MXU-free).
    linear = jnp.sum(z * w, axis=-1, keepdims=True) + b   # (TB, 1)
    t = jnp.tanh(linear)                                  # (TB, 1), EUP

    # z_new = z + u * tanh(linear)   (broadcast (1,D) * (TB,1))
    znew_ref[...] = (z + u * t).astype(znew_ref.dtype)

    # det = |1 + (1 - t^2) * (w·u)|   (psi @ u collapsed to a scalar multiply)
    det_ref[...] = jnp.abs(1.0 + (1.0 - t * t) * w_dot_u).astype(det_ref.dtype)


def _pick_tile(B, D, vmem_budget_bytes=8 * 1024 * 1024):
    """Largest batch tile inside a conservative VMEM budget, >= 2 grid steps when possible."""
    bytes_per_row = 4 * D                     # f32 compute
    # z-in + z_new-out, double-buffered => ~4 resident tiles of tb*D*4 bytes.
    max_rows = max(8, vmem_budget_bytes // (4 * bytes_per_row))
    tb = min(1024, max_rows)
    if B > 8:
        # Keep at least 2 grid steps so v7x's two TensorCores both get work.
        tb = min(tb, pl.cdiv(B, 2))
    tb = max(8, ((tb + 7) // 8) * 8)          # round up to a sublane multiple
    return tb


def planar_flow(z, w, u, b, *, tb=None):
    """z: (B, D); w, u: (D,); b: (1,).  Returns (z_new (B, D), det_jacobian (B,) f32)."""
    B, D = z.shape
    if tb is None:
        tb = _pick_tile(B, D)
    grid_n = pl.cdiv(B, tb)
    B_pad = grid_n * tb
    z_p = z if B_pad == B else jnp.pad(z, ((0, B_pad - B), (0, 0)))

    w2 = w.reshape(1, D)
    u2 = u.reshape(1, D)
    # Scalars for SMEM: [b, w·u].  w·u precomputed once -> no second matvec in-kernel.
    scalars = jnp.stack([
        b.astype(jnp.float32).reshape(()),
        jnp.dot(w.astype(jnp.float32), u.astype(jnp.float32)),
    ])

    z_new, det = pl.pallas_call(
        planar_flow_kernel,
        out_shape=(
            jax.ShapeDtypeStruct((B_pad, D), z.dtype),
            jax.ShapeDtypeStruct((B_pad, 1), jnp.float32),   # det stays f32
        ),
        grid_spec=pltpu.PrefetchScalarGridSpec(
            num_scalar_prefetch=0,
            grid=(grid_n,),
            in_specs=[
                pl.BlockSpec(memory_space=pltpu.MemorySpace.SMEM),  # [b, w·u]
                pl.BlockSpec((tb, D), lambda i: (i, 0)),            # z tile
                pl.BlockSpec((1, D), lambda i: (0, 0)),             # w (replicated)
                pl.BlockSpec((1, D), lambda i: (0, 0)),             # u (replicated)
            ],
            out_specs=[
                pl.BlockSpec((tb, D), lambda i: (i, 0)),            # z_new tile
                pl.BlockSpec((tb, 1), lambda i: (i, 0)),            # det tile (f32)
            ],
        ),
        compiler_params=pltpu.CompilerParams(
            dimension_semantics=("parallel",)),
    )(scalars, z_p, w2, u2)
    return z_new[:B], det[:B, 0]


def planar_flow_ref(z, w, u, b):
    linear = z @ w + b[0]
    t = jnp.tanh(linear)
    z_new = z + u[None, :] * t[:, None]
    psi = (1.0 - t * t)[:, None] * w[None, :]
    det = jnp.abs(1.0 + psi @ u)
    return z_new, det


if __name__ == "__main__":
    key = jax.random.PRNGKey(0)
    k_z, k_u, k_w, k_b = jax.random.split(key, 4)

    B, D = 16, 32   # batch=16, latent_dim=32
    z = jax.random.normal(k_z, (B, D), dtype=jnp.float32)
    u = jax.random.normal(k_u, (D,), dtype=jnp.float32)
    w = jax.random.normal(k_w, (D,), dtype=jnp.float32)
    b = jax.random.normal(k_b, (1,), dtype=jnp.float32)

    z_new, det = planar_flow(z, w, u, b)
    jax.block_until_ready((z_new, det))

    z_new_ref, det_ref = planar_flow_ref(z, w, u, b)
    assert z_new.shape == (B, D) and det.shape == (B,)
    assert jnp.allclose(z_new, z_new_ref, atol=1e-5, rtol=1e-5)
    assert jnp.allclose(det, det_ref, atol=1e-5, rtol=1e-5)

    # Non-divisible batch: exercises the cdiv grid + padding path (no assert).
    B2 = 20
    z2 = jax.random.normal(jax.random.PRNGKey(1), (B2, D), dtype=jnp.float32)
    z_new2, det2 = planar_flow(z2, w, u, b)
    jax.block_until_ready((z_new2, det2))
    z_new2_ref, det2_ref = planar_flow_ref(z2, w, u, b)
    assert z_new2.shape == (B2, D) and det2.shape == (B2,)
    assert jnp.allclose(z_new2, z_new2_ref, atol=1e-5, rtol=1e-5)
    assert jnp.allclose(det2, det2_ref, atol=1e-5, rtol=1e-5)

    print("KERNEL_OK")
</pallas_src>

<mosaic_0001>
module attributes {stable_mosaic.version = 11 : i64} {
  func.func @planar_flow_kernel(%arg0: i32, %arg1: memref<2xf32, #tpu.memory_space<smem>>, %arg2: memref<8x32xf32, #tpu.memory_space<vmem>>, %arg3: memref<1x32xf32, #tpu.memory_space<vmem>>, %arg4: memref<1x32xf32, #tpu.memory_space<vmem>>, %arg5: memref<8x32xf32, #tpu.memory_space<vmem>>, %arg6: memref<8x1xf32, #tpu.memory_space<vmem>>) attributes {dimension_semantics = [#tpu.dimension_semantics<parallel>], iteration_bounds = array<i64: 2>, scalar_prefetch = 0 : i64, scratch_operands = 0 : i64, tpu.core_type = #tpu.core_type<tc>, window_params = [{transform_indices = @transform_0, window_bounds = array<i64: 2>}, {transform_indices = @transform_1, window_bounds = array<i64: 8, 32>}, {pipeline_mode = #tpu.pipeline_mode<synchronous>, transform_indices = @transform_2, window_bounds = array<i64: 1, 32>}, {pipeline_mode = #tpu.pipeline_mode<synchronous>, transform_indices = @transform_3, window_bounds = array<i64: 1, 32>}, {transform_indices = @transform_4, window_bounds = array<i64: 8, 32>}, {transform_indices = @transform_5, window_bounds = array<i64: 8, 1>}]} {
    %c0 = arith.constant 0 : index
    %c0_0 = arith.constant 0 : index
    %0 = vector.load %arg2[%c0, %c0_0] : memref<8x32xf32, #tpu.memory_space<vmem>>, vector<8x32xf32>
    %c0_1 = arith.constant 0 : index
    %c0_2 = arith.constant 0 : index
    %1 = vector.load %arg3[%c0_1, %c0_2] : memref<1x32xf32, #tpu.memory_space<vmem>>, vector<1x32xf32>
    %c0_3 = arith.constant 0 : index
    %c0_4 = arith.constant 0 : index
    %2 = vector.load %arg4[%c0_3, %c0_4] : memref<1x32xf32, #tpu.memory_space<vmem>>, vector<1x32xf32>
    %c0_5 = arith.constant 0 : index
    %3 = memref.load %arg1[%c0_5] : memref<2xf32, #tpu.memory_space<smem>>
    %c1 = arith.constant 1 : index
    %4 = memref.load %arg1[%c1] : memref<2xf32, #tpu.memory_space<smem>>
    %5 = vector.broadcast %1 : vector<1x32xf32> to vector<8x32xf32>
    %6 = arith.mulf %0, %5 : vector<8x32xf32>
    %cst = arith.constant dense<0.000000e+00> : vector<8xf32>
    %7 = vector.multi_reduction <add>, %6, %cst [1] : vector<8x32xf32> to vector<8xf32>
    %8 = vector.shape_cast %7 : vector<8xf32> to vector<8x1xf32>
    %9 = vector.broadcast %3 : f32 to vector<8x1xf32>
    %10 = arith.addf %8, %9 : vector<8x1xf32>
    %11 = math.tanh %10 : vector<8x1xf32>
    %12 = vector.broadcast %2 : vector<1x32xf32> to vector<8x32xf32>
    %13 = vector.broadcast %11 : vector<8x1xf32> to vector<8x32xf32>
    %14 = arith.mulf %12, %13 : vector<8x32xf32>
    %15 = arith.addf %0, %14 : vector<8x32xf32>
    %c0_6 = arith.constant 0 : index
    %c0_7 = arith.constant 0 : index
    %16 = vector.load %arg5[%c0_6, %c0_7] : memref<8x32xf32, #tpu.memory_space<vmem>>, vector<8x32xf32>
    tpu.vector_store %arg5[%c0_6, %c0_7], %15 {strides = array<i32>} : memref<8x32xf32, #tpu.memory_space<vmem>>, vector<8x32xf32>,
    %17 = arith.mulf %11, %11 : vector<8x1xf32>
    %cst_8 = arith.constant 1.000000e+00 : f32
    %18 = vector.broadcast %cst_8 : f32 to vector<8x1xf32>
    %19 = arith.subf %18, %17 : vector<8x1xf32>
    %20 = vector.broadcast %4 : f32 to vector<8x1xf32>
    %21 = arith.mulf %19, %20 : vector<8x1xf32>
    %cst_9 = arith.constant 1.000000e+00 : f32
    %22 = vector.broadcast %cst_9 : f32 to vector<8x1xf32>
    %23 = arith.addf %22, %21 : vector<8x1xf32>
    %24 = math.absf %23 : vector<8x1xf32>
    %c0_10 = arith.constant 0 : index
    %c0_11 = arith.constant 0 : index
    %25 = vector.load %arg6[%c0_10, %c0_11] : memref<8x1xf32, #tpu.memory_space<vmem>>, vector<8x1xf32>
    tpu.vector_store %arg6[%c0_10, %c0_11], %24 {strides = array<i32>} : memref<8x1xf32, #tpu.memory_space<vmem>>, vector<8x1xf32>,
    return
  }
  func.func @transform_0(%arg0: i32) -> i32 {
    %c0_i32 = arith.constant 0 : i32
    %c0_i32_0 = arith.constant 0 : i32
    return %c0_i32 : i32
  }
  func.func @transform_1(%arg0: i32) -> (i32, i32) {
    %c0_i32 = arith.constant 0 : i32
    %c0_i32_0 = arith.constant 0 : i32
    return %arg0, %c0_i32 : i32, i32
  }
  func.func @transform_2(%arg0: i32) -> (i32, i32) {
    %c0_i32 = arith.constant 0 : i32
    %c0_i32_0 = arith.constant 0 : i32
    %c0_i32_1 = arith.constant 0 : i32
    return %c0_i32, %c0_i32_0 : i32, i32
  }
  func.func @transform_3(%arg0: i32) -> (i32, i32) {
    %c0_i32 = arith.constant 0 : i32
    %c0_i32_0 = arith.constant 0 : i32
    %c0_i32_1 = arith.constant 0 : i32
    return %c0_i32, %c0_i32_0 : i32, i32
  }
  func.func @transform_4(%arg0: i32) -> (i32, i32) {
    %c0_i32 = arith.constant 0 : i32
    %c0_i32_0 = arith.constant 0 : i32
    return %arg0, %c0_i32 : i32, i32
  }
  func.func @transform_5(%arg0: i32) -> (i32, i32) {
    %c0_i32 = arith.constant 0 : i32
    %c0_i32_0 = arith.constant 0 : i32
    return %arg0, %c0_i32 : i32, i32
  }
}

</mosaic_0001>

<llo_original>
// kernel: tpu_custom_call.1
$region0: #{tpu_custom_call.1}
  #allocation0 [shape = 'u32[]', space=smem, size = 0x4, offset = 0x4, fixed_abs, tag = 'smem constant byte address 0x4 - core index']
  #allocation1 [shape = 'u32[144,128]{1,0:T(1,128)}', space=vmem, size = 0x12000, scoped, tag = 'internal scratch']
  %s0 = inlined_call_operand.hbm [shape: f32[2], index: 0, kind: input, shape index: {}]
  %s1 = inlined_call_operand.hbm [shape: f32[16,32], index: 1, kind: input, shape index: {}]
  %s2 = inlined_call_operand.vmem [shape: f32[1,32], index: 2, kind: input, shape index: {}]
  %s3 = inlined_call_operand.vmem [shape: f32[1,32], index: 3, kind: input, shape index: {}]
  %s4 = inlined_call_operand.hbm [shape: f32[16,32], index: 4, kind: output, shape index: {0}]
  %s5 = inlined_call_operand.vmem [shape: f32[16,1], index: 5, kind: output, shape index: {1}]
  %6 = xla_tuple %s4, %s5
  %s7 = sld [smem:[#allocation0]]
  $region65: #{tpu_custom_call.1} parent=0
    _
  %s9 = ssub.s32 1, %s7
  %s10 = scalar_select 0, %s9, %s7
  $region1: #{tpu_custom_call.1} parent=0
    #allocation2 [shape = 'u8[512]{0}', space=smem, size = 0x200, scoped, tag = 'input window, operand 0, single buffered']
    #allocation3 [shape = 's32[2]{0}', space=sflag, size = 0x8, scoped, tag = 'scoped memory for tpu_custom_call.1']
    #allocation4 [shape = 's32[2]{0}', space=sflag, size = 0x8, scoped, tag = 'scoped memory for tpu_custom_call.1']
    #allocation5 [shape = 's32[2]{0}', space=sflag, size = 0x8, scoped, tag = 'scoped memory for tpu_custom_call.1']
    #allocation6 [shape = 'u8[8192]{0}', space=vmem, size = 0x2000, scoped, tag = 'input window, operand 1']
    #allocation7 [shape = 'u8[8192]{0}', space=vmem, size = 0x2000, scoped, tag = 'output window, operand 0']
    %11 = vsyncpa [#allocation5], 0
    %12 = vsyncpa [#allocation3], 0
    %s13 = scalar_lea.sflag [#allocation3], 1
    %14 = vsyncpa %s13, 0
    %15 = vsyncpa [#allocation4], 0
    %s16 = scalar_lea.sflag [#allocation4], 1
    %17 = vsyncpa %s16, 0
    loop: start=0, step=1, limit=4
    $region2: #{tpu_custom_call.1} parent=1 // loop_pre_header
      _
    $region3: #{tpu_custom_call.1} parent=1 // loop_header
      %s19 = sphi 0, %s23
      %p20 = scmp.ge.s32.totalorder %s19, 4
      %s27 = sphi 0, %s27
      %s29 = sphi 0, %s27
      %s30 = sphi 0, %s29
      %s44 = sphi 0, %s30
      %s50 = sphi 0, %s52
      %s53 = sphi 0, %s50
      %s54 = sphi 0, %s53
      %s70 = sphi 0, %s54
      %s74 = sphi 0, %s74
      %s76 = sphi 0, %s74
      %s77 = sphi 0, %s76
      %s91 = sphi 0, %s77
      %s95 = sphi 0, %s95
      %s97 = sphi 0, %s95
      %s98 = sphi 0, %s97
      %s112 = sphi 0, %s98
      %s118 = sphi 0, %s120
      %s121 = sphi 0, %s118
      %s122 = sphi 0, %s121
      %s138 = sphi 0, %s122
      %s144 = sphi 0, %s146
      %s147 = sphi 0, %s144
      %s148 = sphi 0, %s147
      %s164 = sphi 0, %s148
    $region4: #{tpu_custom_call.1} parent=1 // loop_header_branch
      %22 = sbr.rel (%p20) target = $region8
    $region5: #{tpu_custom_call.1} parent=1 // loop_body
      %s24 = ssub.s32 %s19, 1
      %s25 = ssub.s32 %s19, 2
      %s26 = sadd.s32 %s19, 1
      %s28 = sadd.s32 %s27, 1
      %p31 = scmp.eq.s32.totalorder %s19, 1
      %p32 = scmp.ne.s32.totalorder %s27, %s29
      %p33 = scmp.eq.s32.totalorder %s19, 0
      %p34 = por %p32, %p33
      %p35 = scmp.ne.s32.totalorder %s27, %s29
      %p36 = scmp.eq.s32.totalorder %s24, 1
      %p37 = por %p35, %p36
      %p38 = scmp.ne.s32.totalorder %s29, %s30
      %p39 = scmp.eq.s32.totalorder %s24, 0
      %p40 = por %p38, %p39
      %p41 = scmp.ne.s32.totalorder %s29, %s30
      %p42 = scmp.eq.s32.totalorder %s25, 1
      %p43 = por %p41, %p42
      %p45 = scmp.ne.s32.totalorder %s30, %s44
      %p46 = scmp.eq.s32.totalorder %s25, 0
      %p47 = por %p45, %p46
      %s48 = ssub.s32 %s19, %s26
      %p49 = scmp.eq.s32.totalorder %s48, 0
      %s51 = sadd.s32 %s50, 1
      %s52 = scalar_select %p49, %s50, %s51
      %p55 = pneg %p49
      %p56 = scmp.eq.s32.totalorder %s19, 1
      %p57 = por %p55, %p56
      %p58 = scmp.ne.s32.totalorder %s50, %s53
      %p59 = scmp.eq.s32.totalorder %s19, 0
      %p60 = por %p58, %p59
      %p61 = scmp.ne.s32.totalorder %s50, %s53
      %p62 = scmp.eq.s32.totalorder %s24, 1
      %p63 = por %p61, %p62
      %p64 = scmp.ne.s32.totalorder %s53, %s54
      %p65 = scmp.eq.s32.totalorder %s24, 0
      %p66 = por %p64, %p65
      %p67 = scmp.ne.s32.totalorder %s53, %s54
      %p68 = scmp.eq.s32.totalorder %s25, 1
      %p69 = por %p67, %p68
      %p71 = scmp.ne.s32.totalorder %s54, %s70
      %p72 = scmp.eq.s32.totalorder %s25, 0
      %p73 = por %p71, %p72
      %s75 = sadd.s32 %s74, 1
      %p78 = scmp.eq.s32.totalorder %s19, 1
      %p79 = scmp.ne.s32.totalorder %s74, %s76
      %p80 = scmp.eq.s32.totalorder %s19, 0
      %p81 = por %p79, %p80
      %p82 = scmp.ne.s32.totalorder %s74, %s76
      %p83 = scmp.eq.s32.totalorder %s24, 1
      %p84 = por %p82, %p83
      %p85 = scmp.ne.s32.totalorder %s76, %s77
      %p86 = scmp.eq.s32.totalorder %s24, 0
      %p87 = por %p85, %p86
      %p88 = scmp.ne.s32.totalorder %s76, %s77
      %p89 = scmp.eq.s32.totalorder %s25, 1
      %p90 = por %p88, %p89
      %p92 = scmp.ne.s32.totalorder %s77, %s91
      %p93 = scmp.eq.s32.totalorder %s25, 0
      %p94 = por %p92, %p93
      %s96 = sadd.s32 %s95, 1
      %p99 = scmp.eq.s32.totalorder %s19, 1
      %p100 = scmp.ne.s32.totalorder %s95, %s97
      %p101 = scmp.eq.s32.totalorder %s19, 0
      %p102 = por %p100, %p101
      %p103 = scmp.ne.s32.totalorder %s95, %s97
      %p104 = scmp.eq.s32.totalorder %s24, 1
      %p105 = por %p103, %p104
      %p106 = scmp.ne.s32.totalorder %s97, %s98
      %p107 = scmp.eq.s32.totalorder %s24, 0
      %p108 = por %p106, %p107
      %p109 = scmp.ne.s32.totalorder %s97, %s98
      %p110 = scmp.eq.s32.totalorder %s25, 1
      %p111 = por %p109, %p110
      %p113 = scmp.ne.s32.totalorder %s98, %s112
      %p114 = scmp.eq.s32.totalorder %s25, 0
      %p115 = por %p113, %p114
      %s116 = ssub.s32 %s19, %s26
      %p117 = scmp.eq.s32.totalorder %s116, 0
      %s119 = sadd.s32 %s118, 1
      %s120 = scalar_select %p117, %s118, %s119
      %p123 = pneg %p117
      %p124 = scmp.eq.s32.totalorder %s19, 1
      %p125 = por %p123, %p124
      %p126 = scmp.ne.s32.totalorder %s118, %s121
      %p127 = scmp.eq.s32.totalorder %s19, 0
      %p128 = por %p126, %p127
      %p129 = scmp.ne.s32.totalorder %s118, %s121
      %p130 = scmp.eq.s32.totalorder %s24, 1
      %p131 = por %p129, %p130
      %p132 = scmp.ne.s32.totalorder %s121, %s122
      %p133 = scmp.eq.s32.totalorder %s24, 0
      %p134 = por %p132, %p133
      %p135 = scmp.ne.s32.totalorder %s121, %s122
      %p136 = scmp.eq.s32.totalorder %s25, 1
      %p137 = por %p135, %p136
      %p139 = scmp.ne.s32.totalorder %s122, %s138
      %p140 = scmp.eq.s32.totalorder %s25, 0
      %p141 = por %p139, %p140
      %s142 = ssub.s32 %s19, %s26
      %p143 = scmp.eq.s32.totalorder %s142, 0
      %s145 = sadd.s32 %s144, 1
      %s146 = scalar_select %p143, %s144, %s145
      %p149 = pneg %p143
      %p150 = scmp.eq.s32.totalorder %s19, 1
      %p151 = por %p149, %p150
      %p152 = scmp.ne.s32.totalorder %s144, %s147
      %p153 = scmp.eq.s32.totalorder %s19, 0
      %p154 = por %p152, %p153
      %p155 = scmp.ne.s32.totalorder %s144, %s147
      %p156 = scmp.eq.s32.totalorder %s24, 1
      %p157 = por %p155, %p156
      %p158 = scmp.ne.s32.totalorder %s147, %s148
      %p159 = scmp.eq.s32.totalorder %s24, 0
      %p160 = por %p158, %p159
      %p161 = scmp.ne.s32.totalorder %s147, %s148
      %p162 = scmp.eq.s32.totalorder %s25, 1
      %p163 = por %p161, %p162
      %p165 = scmp.ne.s32.totalorder %s148, %s164
      %p166 = scmp.eq.s32.totalorder %s25, 0
      %p167 = por %p165, %p166
      %p168 = scmp.le.s32.totalorder 1, %s19
      %p169 = scmp.lt.s32.totalorder %s19, 3
      %p170 = pnand %p168, %p169
      %p171 = pneg %p170
      // Predicated region
      $region9: #{tpu_custom_call.1} parent=5 // pred_check
        _
      $region10: #{tpu_custom_call.1} parent=5 // pred_check_branch
        %173 = sbr.rel (%p170) target = $region12
      $region11: #{tpu_custom_call.1} parent=5 // pred_region
        %s174 = ssub.s32 %s19, 1
        // Predicated region
        $region13: #{tpu_custom_call.1} parent=11 // pred_check
          %p175 = pneg %p40
        $region14: #{tpu_custom_call.1} parent=11 // pred_check_branch
          %177 = sbr.rel (%p175) target = $region16
        $region15: #{tpu_custom_call.1} parent=11 // pred_region
          %s179 = ssub.s32 16, 16
          %180 = vsyncadd [#allocation5], %s179
          %183 = dma.hbm_to_smem %s0, 16, [#allocation2], [#allocation5]
        $region16: #{tpu_custom_call.1} parent=11 // pred_fallthru
          _
        // Predicated region
        $region17: #{tpu_custom_call.1} parent=11 // pred_check
          %p184 = pneg %p87
        $region18: #{tpu_custom_call.1} parent=11 // pred_check_branch
          %186 = sbr.rel (%p184) target = $region20
        $region19: #{tpu_custom_call.1} parent=11 // pred_region
          _
        $region20: #{tpu_custom_call.1} parent=11 // pred_fallthru
          _
        // Predicated region
        $region21: #{tpu_custom_call.1} parent=11 // pred_check
          %p187 = pneg %p108
        $region22: #{tpu_custom_call.1} parent=11 // pred_check_branch
          %189 = sbr.rel (%p187) target = $region24
        $region23: #{tpu_custom_call.1} parent=11 // pred_region
          _
        $region24: #{tpu_custom_call.1} parent=11 // pred_fallthru
          _
      $region12: #{tpu_custom_call.1} parent=5 // pred_fallthru
        _
      %p190 = scmp.lt.s32.totalorder %s19, 2
      // Predicated region
      $region25: #{tpu_custom_call.1} parent=5 // pred_check
        %p191 = pneg %p190
      $region26: #{tpu_custom_call.1} parent=5 // pred_check_branch
        %193 = sbr.rel (%p191) target = $region28
      $region27: #{tpu_custom_call.1} parent=5 // pred_region
        // Predicated region
        $region29: #{tpu_custom_call.1} parent=27 // pred_check
          %p194 = pneg %p60
        $region30: #{tpu_custom_call.1} parent=27 // pred_check_branch
          %196 = sbr.rel (%p194) target = $region32
        $region31: #{tpu_custom_call.1} parent=27 // pred_region
          %s197 = sand.u32 %s50, 1
          %s198 = scalar_lea.sflag [#allocation3], %s197
          %s199 = sand.u32 %s50, 1
          %s200 = smul.addr %s199, 8
          %s201 = scalar_lea.vmem [#allocation6], %s200
          %s203 = ssub.s32 128, 128
          %204 = vsyncadd %s198, %s203
          %s205 = smul.addr %s19, 128
          %s206 = scalar_lea.hbm %s1, %s205
          %s208 = sshll.u32 %s201, 4
          %s209 = int_to_ptr.vmem [resolvable:$true] %s208
          %211 = dma.hbm_to_vmem [thread:$0]  %s206, 128, %s209, %s198
        $region32: #{tpu_custom_call.1} parent=27 // pred_fallthru
          _
      $region28: #{tpu_custom_call.1} parent=5 // pred_fallthru
        _
      %p212 = scmp.le.s32.totalorder 1, %s19
      %p213 = scmp.lt.s32.totalorder %s19, 3
      %p214 = pnand %p212, %p213
      %p215 = pneg %p214
      // Predicated region
      $region33: #{tpu_custom_call.1} parent=5 // pred_check
        _
      $region34: #{tpu_custom_call.1} parent=5 // pred_check_branch
        %217 = sbr.rel (%p214) target = $region36
      $region35: #{tpu_custom_call.1} parent=5 // pred_region
        %s218 = ssub.s32 %s19, 1
        // Predicated region
        $region37: #{tpu_custom_call.1} parent=35 // pred_check
          %p219 = pneg %p40
        $region38: #{tpu_custom_call.1} parent=35 // pred_check_branch
          %221 = sbr.rel (%p219) target = $region40
        $region39: #{tpu_custom_call.1} parent=35 // pred_region
          %222 = dma.done [#allocation5], 16
        $region40: #{tpu_custom_call.1} parent=35 // pred_fallthru
          _
        %s223 = sand.u32 %s53, 1
        %s224 = scalar_lea.sflag [#allocation3], %s223
        %s225 = sand.u32 %s53, 1
        %s226 = smul.addr %s225, 8
        %s227 = scalar_lea.vmem [#allocation6], %s226
        // Predicated region
        $region41: #{tpu_custom_call.1} parent=35 // pred_check
          %p228 = pneg %p66
        $region42: #{tpu_custom_call.1} parent=35 // pred_check_branch
          %230 = sbr.rel (%p228) target = $region44
        $region43: #{tpu_custom_call.1} parent=35 // pred_region
          %231 = dma.done %s224, 128
        $region44: #{tpu_custom_call.1} parent=35 // pred_fallthru
          _
        %232 = sfence
        %p233 = pneg %p40
        %p234 = pneg %p37
        %s235 = sand.u32 %s53, 1
        %s236 = scalar_lea.sflag [#allocation3], %s235
        %s237 = sand.u32 %s53, 1
        %s238 = smul.addr %s237, 8
        %s239 = scalar_lea.vmem [#allocation6], %s238
        %p240 = pneg %p66
        %p241 = pneg %p63
        %p242 = pneg %p87
        %p243 = pneg %p84
        %p244 = pneg %p108
        %p245 = pneg %p105
        %p246 = pneg %p134
        %p247 = pneg %p131
        %s248 = sand.u32 %s121, 1
        %s249 = scalar_lea.sflag [#allocation4], %s248
        %s250 = sand.u32 %s121, 1
        %s251 = smul.addr %s250, 8
        %s252 = scalar_lea.vmem [#allocation7], %s251
        %p253 = pneg %p160
        %p254 = pneg %p157
        %p255 = scmp.lt.s32.totalorder %s24, 1
        %s256 = scalar_select %p255, %s24, 1
        %s257 = smul.addr %s256, 8
        %s258 = scalar_lea.vmem %s5, %s257
        %p259 = scmp.lt.s32.totalorder %s24, 1
        %s260 = scalar_select %p259, %s24, 1
        %s261 = smul.addr %s260, 8
        %s262 = scalar_lea.vmem %s5, %s261
        %v263 = vld [vmem:[%s227] sm:$0xff]
        %v264 = vld [vmem:[%s2] sm:$0x1]
        %v265 = vld [vmem:[%s3] sm:$0x1]
        %s266 = sld [smem:[#allocation2]]
        %s267 = sld [smem:[#allocation2 + $0x1]]
        %v269 = vlaneseq
        %v270 = vshrl.u32 %v269, 7
        %v271 = vsub.s32 0, %v270
        %v272 = vrot.slane %v264, %v271
        %v274 = vmul.f32 %v263, %v272
        %vm275 = vcmask 261120
        %v276 = vsel %vm275, %v274, 0.0
        %277 = vadd.xlane.f32.xlu0 %v276
        %v278 = vpop.xlane.xlu0 %277
        %v279 = vstv %s266
        %v280 = vadd.f32 %v278, %v279
        %v281 = vtanh.pop %v280
        %v283 = vlaneseq
        %v284 = vshrl.u32 %v283, 7
        %v285 = vsub.s32 0, %v284
        %v286 = vrot.slane %v265, %v285
        %v288 = vmul.f32 %v286, %v281
        %v289 = vadd.f32 %v263, %v288
        %290 = vst.msk [vmem:[%s252] sm:$0xff] %vm275, %v289
        %v291 = vmul.f32 %v281, %v281
        %v292 = vsub.f32 1.0, %v291
        %v293 = vstv %s267
        %v294 = vmul.f32 %v292, %v293
        %v295 = vadd.f32 %v294, 1.0
        %v296 = vand.u32 2147483647, %v295
        %vm297 = vcmask 7168
        %298 = vst.msk [vmem:[%s262] sm:$0xff] %vm297, %v296
        %s299 = sand.u32 %s121, 1
        %s300 = scalar_lea.sflag [#allocation4], %s299
        %s301 = sand.u32 %s121, 1
        %s302 = smul.addr %s301, 8
        %s303 = scalar_lea.vmem [#allocation7], %s302
        %p304 = scmp.lt.s32.totalorder %s24, 1
        %s305 = scalar_select %p304, %s24, 1
        %s306 = smul.addr %s305, 8
        %s307 = scalar_lea.vmem %s5, %s306
        // Predicated region
        $region45: #{tpu_custom_call.1} parent=35 // pred_check
          %p308 = pneg %p131
        $region46: #{tpu_custom_call.1} parent=35 // pred_check_branch
          %310 = sbr.rel (%p308) target = $region48
        $region47: #{tpu_custom_call.1} parent=35 // pred_region
          %s312 = ssub.s32 128, 128
          %313 = vsyncadd %s300, %s312
          %s314 = smul.addr %s24, 128
          %s315 = scalar_lea.hbm %s4, %s314
          %s317 = sshll.u32 %s303, 4
          %s318 = int_to_ptr.vmem [resolvable:$true] %s317
          %320 = dma.vmem_to_hbm [thread:$0]  %s318, 128, %s315, %s300
        $region48: #{tpu_custom_call.1} parent=35 // pred_fallthru
          _
        // Predicated region
        $region49: #{tpu_custom_call.1} parent=35 // pred_check
          %p321 = pneg %p157
        $region50: #{tpu_custom_call.1} parent=35 // pred_check_branch
          %323 = sbr.rel (%p321) target = $region52
        $region51: #{tpu_custom_call.1} parent=35 // pred_region
          _
        $region52: #{tpu_custom_call.1} parent=35 // pred_fallthru
          _
      $region36: #{tpu_custom_call.1} parent=5 // pred_fallthru
        _
      %p324 = scmp.le.s32.totalorder 2, %s19
      // Predicated region
      $region53: #{tpu_custom_call.1} parent=5 // pred_check
        %p325 = pneg %p324
      $region54: #{tpu_custom_call.1} parent=5 // pred_check_branch
        %327 = sbr.rel (%p325) target = $region56
      $region55: #{tpu_custom_call.1} parent=5 // pred_region
        %s328 = ssub.s32 %s19, 2
        // Predicated region
        $region57: #{tpu_custom_call.1} parent=55 // pred_check
          %p329 = pneg %p137
        $region58: #{tpu_custom_call.1} parent=55 // pred_check_branch
          %331 = sbr.rel (%p329) target = $region60
        $region59: #{tpu_custom_call.1} parent=55 // pred_region
          %s332 = sand.u32 %s122, 1
          %s333 = scalar_lea.sflag [#allocation4], %s332
          %s334 = sand.u32 %s122, 1
          %s335 = smul.addr %s334, 8
          %s336 = scalar_lea.vmem [#allocation7], %s335
          %337 = dma.done %s333, 128
        $region60: #{tpu_custom_call.1} parent=55 // pred_fallthru
          _
        // Predicated region
        $region61: #{tpu_custom_call.1} parent=55 // pred_check
          %p338 = pneg %p163
        $region62: #{tpu_custom_call.1} parent=55 // pred_check_branch
          %340 = sbr.rel (%p338) target = $region64
        $region63: #{tpu_custom_call.1} parent=55 // pred_region
          %p341 = scmp.lt.s32.totalorder %s25, 1
          %s342 = scalar_select %p341, %s25, 1
          %s343 = smul.addr %s342, 8
          %s344 = scalar_lea.vmem %s5, %s343
        $region64: #{tpu_custom_call.1} parent=55 // pred_fallthru
          _
      $region56: #{tpu_custom_call.1} parent=5 // pred_fallthru
        _
    $region6: #{tpu_custom_call.1} parent=1 // loop_footer
      %s23 = sadd.s32 1, %s19
    $region7: #{tpu_custom_call.1} parent=1 // loop_footer_branch
      %18 = sbr.rel target = $region3
    $region8: #{tpu_custom_call.1} parent=1 // loop_exit
      _
    %345 = vsyncpa [#allocation3], 1
    %s346 = scalar_lea.sflag [#allocation3], 1
    %347 = vsyncpa %s346, 1
    %348 = vsyncpa [#allocation4], 1
    %s349 = scalar_lea.sflag [#allocation4], 1
    %350 = vsyncpa %s349, 1
    %351 = vsyncpa [#allocation5], 1
    %s352 = scalar_lea.sflag [#allocation5], 1
    %353 = vsyncpa %s352, 1

</llo_original>
